<compile_context>
chip_gen: v7x
topology: tpu7x:2x2x1
jax: 0.10.0
libtpu: 0.0.40
codegen_flags: <defaults>
</compile_context>

<pallas_src>
import math

import jax
import jax.numpy as jnp
from jax.experimental import pallas as pl
from jax.experimental.pallas import tpu as pltpu


LANE = 128  # TPU vreg lane width


def _relu_kernel(x_ref, o_ref):
    # Elementwise hot path: VPU max against zero on the whole VMEM tile.
    o_ref[...] = jnp.maximum(x_ref[...], jnp.zeros((), dtype=x_ref.dtype))


def _sublane_tile(dtype) -> int:
    """Sublane packing tile: 8 for 4-byte dtypes, 16 for 2-byte, 32 for 1-byte."""
    itemsize = jnp.dtype(dtype).itemsize
    return max(8, 32 // itemsize)


def _round_up(a: int, b: int) -> int:
    return pl.cdiv(a, b) * b


def _chip_tuning():
    """Return (target_block_bytes, vmem_limit_bytes, num_tensorcores)."""
    target, vmem, ntc = 4 << 20, 32 << 20, 1  # safe defaults (fit every chip)
    try:
        kind = jax.devices()[0].device_kind.lower()
    except Exception:
        return target, vmem, ntc
    if "v5" in kind or "v6" in kind:
        # 128 MiB VMEM, single TensorCore: slightly larger blocks are free.
        target, vmem, ntc = 8 << 20, 48 << 20, 1
    elif "7" in kind:
        # v7x: 64 MiB VMEM per TC, 2 TensorCores -> keep 4 MiB blocks.
        target, vmem, ntc = 4 << 20, 32 << 20, 2
    return target, vmem, ntc


def _relu_2d(x2d: jax.Array, sub: int) -> jax.Array:
    """Run the ReLU kernel on a lane-dense 2D slab (cols % 128 == 0).

    Rows need NOT be a multiple of the sublane tile: block_rows is kept a
    multiple of `sub` and the trailing partial row-block is masked by Pallas.
    """
    rows, cols = x2d.shape
    itemsize = jnp.dtype(x2d.dtype).itemsize
    target_bytes, vmem_limit, ntc = _chip_tuning()

    # ---- column tiling (keep the native wide, lane-dense last dim) ----
    if cols * itemsize * sub <= target_bytes:
        block_cols = cols
    else:
        block_cols = max(LANE, (target_bytes // (itemsize * sub)) // LANE * LANE)

    # ---- row tiling: ~target_bytes per buffer, multiple of the sublane tile ----
    target_rows = max(sub, (target_bytes // (block_cols * itemsize)) // sub * sub)
    if rows > target_rows:
        block_rows = target_rows
    elif ntc >= 2 and rows >= 2 * sub:
        # Multi-TC chip: split small/medium inputs into 2 blocks so both
        # TensorCores get work on the "parallel" grid axis.
        block_rows = _round_up(pl.cdiv(rows, 2), sub)
    else:
        # Single block along rows (full extent is always a legal block dim).
        block_rows = rows

    n_row_blocks = pl.cdiv(rows, block_rows)
    if ntc >= 2 and n_row_blocks > 1 and n_row_blocks % 2 == 1:
        # v7x TC load balance: best-effort even number of row blocks.
        block_rows = max(sub, _round_up(pl.cdiv(rows, n_row_blocks + 1), sub))
        n_row_blocks = pl.cdiv(rows, block_rows)

    grid = (n_row_blocks, pl.cdiv(cols, block_cols))

    return pl.pallas_call(
        _relu_kernel,
        out_shape=jax.ShapeDtypeStruct((rows, cols), x2d.dtype),
        grid_spec=pltpu.PrefetchScalarGridSpec(
            num_scalar_prefetch=0,
            grid=grid,
            in_specs=[pl.BlockSpec((block_rows, block_cols), lambda i, j: (i, j))],
            out_specs=pl.BlockSpec((block_rows, block_cols), lambda i, j: (i, j)),
        ),
        compiler_params=pltpu.CompilerParams(
            dimension_semantics=("parallel", "parallel"),
            vmem_limit_bytes=vmem_limit,
        ),
    )(x2d)


def pallas_relu(x: jax.Array) -> jax.Array:
    """Elementwise ReLU. Pallas kernel on lane-dense layouts, fused fallback otherwise."""
    if x.size == 0:
        return x

    orig_shape = x.shape
    sub = _sublane_tile(x.dtype)

    # Fast path A: last dim is already a lane multiple -> zero-copy 2D view
    # (collapse leading dims; reshape of contiguous leading dims is free).
    if x.ndim >= 2 and x.shape[-1] % LANE == 0:
        rows = math.prod(x.shape[:-1])
        out2d = _relu_2d(x.reshape(rows, x.shape[-1]), sub)
        return out2d.reshape(orig_shape)

    # Fast path B: total element count is a lane multiple -> flat (n/128, 128)
    # slab, still zero-copy (pure reshape, no pad).
    n = x.size
    if n % LANE == 0:
        out2d = _relu_2d(jnp.ravel(x).reshape(n // LANE, LANE), sub)
        return out2d.reshape(orig_shape)

    # Ragged size: padding + post-slice would cost ~3 full HBM passes for a
    # purely bandwidth-bound op, so use a single fused XLA pass instead.
    return jnp.maximum(x, jnp.zeros((), dtype=x.dtype))


class ModelNew:
    """JAX/Pallas equivalent of the Triton-ReLU-wrapping PyTorch ModelNew."""

    def __init__(self):
        pass  # no parameters

    def __call__(self, x: jax.Array) -> jax.Array:
        return pallas_relu(x)


if __name__ == "__main__":
    key = jax.random.PRNGKey(0)
    model = ModelNew()

    # Primary test: small NCHW-style input (2048 elems -> flat (16, 128) Pallas path).
    x = jax.random.normal(key, (2, 4, 16, 16), dtype=jnp.float32)
    y = jax.block_until_ready(model(x))
    ref = jnp.maximum(x, 0.0)
    assert y.shape == x.shape and y.dtype == x.dtype
    assert jnp.allclose(y, ref), "Pallas ReLU mismatch vs reference (f32 flat path)"

    # Aligned last dim with non-sublane-aligned rows (exercises the relaxed
    # fast path + masked partial trailing row block).
    x_a = jax.random.normal(jax.random.PRNGKey(1), (5, 256), dtype=jnp.float32)
    y_a = jax.block_until_ready(model(x_a))
    assert jnp.allclose(y_a, jnp.maximum(x_a, 0.0)), "Pallas ReLU mismatch (2D aligned path)"

    # Awkward ragged size: exercises the fused jnp fallback (no pad/slice).
    x_odd = jax.random.normal(jax.random.PRNGKey(2), (3, 5, 7), dtype=jnp.float32)
    y_odd = jax.block_until_ready(model(x_odd))
    assert jnp.allclose(y_odd, jnp.maximum(x_odd, 0.0)), "ReLU mismatch (ragged fallback)"

    # bf16: dtype-aware sublane tile (16, 128) + aligned fast path.
    x_bf16 = jax.random.normal(jax.random.PRNGKey(3), (4, 16, 128), dtype=jnp.bfloat16)
    y_bf16 = jax.block_until_ready(model(x_bf16))
    assert y_bf16.dtype == jnp.bfloat16
    assert jnp.array_equal(
        y_bf16, jnp.maximum(x_bf16, jnp.bfloat16(0))
    ), "Pallas ReLU mismatch (bf16)"

    print("KERNEL_OK")
</pallas_src>

<mosaic_0001>
module attributes {stable_mosaic.version = 11 : i64} {
  func.func @_relu_kernel(%arg0: i32, %arg1: i32, %arg2: memref<16x128xf32, #tpu.memory_space<vmem>>, %arg3: memref<16x128xf32, #tpu.memory_space<vmem>>) attributes {dimension_semantics = [#tpu.dimension_semantics<parallel>, #tpu.dimension_semantics<parallel>], iteration_bounds = array<i64: 1, 1>, scalar_prefetch = 0 : i64, scratch_operands = 0 : i64, tpu.core_type = #tpu.core_type<tc>, window_params = [{transform_indices = @transform_0, window_bounds = array<i64: 16, 128>}, {transform_indices = @transform_1, window_bounds = array<i64: 16, 128>}]} {
    %c0 = arith.constant 0 : index
    %c0_0 = arith.constant 0 : index
    %0 = vector.load %arg2[%c0, %c0_0] : memref<16x128xf32, #tpu.memory_space<vmem>>, vector<16x128xf32>
    %cst = arith.constant 0.000000e+00 : f32
    %1 = vector.broadcast %cst : f32 to vector<16x128xf32>
    %2 = arith.maximumf %0, %1 : vector<16x128xf32>
    %c0_1 = arith.constant 0 : index
    %c0_2 = arith.constant 0 : index
    %3 = vector.load %arg3[%c0_1, %c0_2] : memref<16x128xf32, #tpu.memory_space<vmem>>, vector<16x128xf32>
    tpu.vector_store %arg3[%c0_1, %c0_2], %2 {strides = array<i32>} : memref<16x128xf32, #tpu.memory_space<vmem>>, vector<16x128xf32>,
    return
  }
  func.func @transform_0(%arg0: i32, %arg1: i32) -> (i32, i32) {
    %c0_i32 = arith.constant 0 : i32
    return %arg0, %arg1 : i32, i32
  }
  func.func @transform_1(%arg0: i32, %arg1: i32) -> (i32, i32) {
    %c0_i32 = arith.constant 0 : i32
    return %arg0, %arg1 : i32, i32
  }
}

</mosaic_0001>

<llo_original>
// kernel: tpu_custom_call.1
$region0: #{tpu_custom_call.1}
  #allocation0 [shape = 'u32[]', space=smem, size = 0x4, offset = 0x4, fixed_abs, tag = 'smem constant byte address 0x4 - core index']
  #allocation1 [shape = 'u32[144,128]{1,0:T(1,128)}', space=vmem, size = 0x12000, scoped, tag = 'internal scratch']
  %s0 = inlined_call_operand.hbm [shape: f32[16,128], index: 0, kind: input, shape index: {}]
  %s1 = inlined_call_operand.hbm [shape: f32[16,128], index: 1, kind: output, shape index: {}]
  %s2 = sld [smem:[#allocation0]]
  $region18: #{tpu_custom_call.1} parent=0
    _
  %s4 = ssub.s32 1, %s2
  %s5 = scalar_select 0, %s4, %s2
  $region1: #{tpu_custom_call.1} parent=0
    #allocation2 [shape = 'u8[8192]{0}', space=vmem, size = 0x2000, scoped, tag = 'input window, operand 0, single buffered']
    #allocation3 [shape = 's32[1]{0}', space=sflag, size = 0x4, scoped, tag = 'scoped memory for tpu_custom_call.1']
    #allocation4 [shape = 's32[1]{0}', space=sflag, size = 0x4, scoped, tag = 'scoped memory for tpu_custom_call.1']
    #allocation5 [shape = 'u8[8192]{0}', space=vmem, size = 0x2000, scoped, tag = 'output window, operand 0, single buffered']
    %6 = vsyncpa [#allocation3], 0
    %7 = vsyncpa [#allocation4], 0
    // Predicated region
    $region2: #{tpu_custom_call.1} parent=1 // pred_check
      _
    $region3: #{tpu_custom_call.1} parent=1 // pred_check_branch
      %9 = sbr.rel (0) target = $region5
    $region4: #{tpu_custom_call.1} parent=1 // pred_region
      %s11 = ssub.s32 256, 256
      %12 = vsyncadd [#allocation3], %s11
      %s13 = sshll.u32 [#allocation2], 4
      %s14 = int_to_ptr.vmem [resolvable:$true] %s13
      %19 = dma.hbm_to_vmem [thread:$0]  %s0, 256, %s14, [#allocation3], 128, 128, 8
    $region5: #{tpu_custom_call.1} parent=1 // pred_fallthru
      _
    // Predicated region
    $region6: #{tpu_custom_call.1} parent=1 // pred_check
      _
    $region7: #{tpu_custom_call.1} parent=1 // pred_check_branch
      %21 = sbr.rel (0) target = $region9
    $region8: #{tpu_custom_call.1} parent=1 // pred_region
      %22 = dma.done [#allocation3], 256
    $region9: #{tpu_custom_call.1} parent=1 // pred_fallthru
      _
    %v23 = vld [vmem:[#allocation2] sm:$0xff]
    %v24 = vld [vmem:[#allocation2 + $0x8] sm:$0xff]
    %v25 = vmax.f32 %v23, 0.0
    %v26 = vmax.f32 %v24, 0.0
    %27 = vst [vmem:[#allocation5] sm:$0xff] %v25
    %28 = vst [vmem:[#allocation5 + $0x8] sm:$0xff] %v26
    // Predicated region
    $region10: #{tpu_custom_call.1} parent=1 // pred_check
      _
    $region11: #{tpu_custom_call.1} parent=1 // pred_check_branch
      %30 = sbr.rel (0) target = $region13
    $region12: #{tpu_custom_call.1} parent=1 // pred_region
      %s32 = ssub.s32 256, 256
      %33 = vsyncadd [#allocation4], %s32
      %s34 = sshll.u32 [#allocation5], 4
      %s35 = int_to_ptr.vmem [resolvable:$true] %s34
      %40 = dma.vmem_to_hbm [thread:$0]  %s35, 256, %s1, [#allocation4], 128, 128, 8
    $region13: #{tpu_custom_call.1} parent=1 // pred_fallthru
      _
    // Predicated region
    $region14: #{tpu_custom_call.1} parent=1 // pred_check
      _
    $region15: #{tpu_custom_call.1} parent=1 // pred_check_branch
      %42 = sbr.rel (0) target = $region17
    $region16: #{tpu_custom_call.1} parent=1 // pred_region
      %43 = dma.done [#allocation4], 256
    $region17: #{tpu_custom_call.1} parent=1 // pred_fallthru
      _
    %44 = vsyncpa [#allocation3], 1
    %45 = vsyncpa [#allocation4], 1

</llo_original>
